<compile_context>
chip_gen: v7x
topology: tpu7x:2x2x1
jax: 0.10.0
libtpu: 0.0.40
codegen_flags: <defaults>
</compile_context>

<pallas_src>
import jax
import jax.numpy as jnp
from jax.experimental import pallas as pl
from jax.experimental.pallas import tpu as pltpu


def _smoothness_kernel(depth_ref, view_ref, mask_ref,
                       dhalo_ref, vhalo_ref, mhalo_ref, out_ref):
    Cd, TH, W = depth_ref.shape            # static block shape (H-tile rows)
    Cv = view_ref.shape[0]
    inv_cv = -1.0 / Cv                     # fold mean's 1/Cv and the negation

    depth = depth_ref[...].astype(jnp.float32)   # (Cd, TH, W)
    view = view_ref[...].astype(jnp.float32)     # (Cv, TH, W) == views[b, 0]
    mask = mask_ref[...].astype(jnp.float32)     # (1,  TH, W) == masks[b, 0]

    ref_view = view * mask                       # reference_view

    # Stack reference_view and depth along channels -> a single XLU roll per
    # direction instead of two (same element volume, half the launches).
    stacked = jnp.concatenate([ref_view, depth], axis=0)         # (Cv+Cd,TH,W)
    diff_x = pltpu.roll(stacked, shift=W - 1, axis=2) - stacked  # col W-1 wraps
    diff_y = pltpu.roll(stacked, shift=TH - 1, axis=1) - stacked  # row TH-1 wraps

    # Edge-aware weights (exp runs on the EUP slot).
    w_x = jnp.exp(jnp.sum(jnp.abs(diff_x[:Cv]), axis=0, keepdims=True) * inv_cv)
    w_y = jnp.exp(jnp.sum(jnp.abs(diff_y[:Cv]), axis=0, keepdims=True) * inv_cv)

    abs_dx = jnp.abs(w_x * diff_x[Cv:])          # (Cd, TH, W)
    abs_dy = jnp.abs(w_y * diff_y[Cv:])          # (Cd, TH, W)

    # ---- x direction: per-column partial sums, then seam fix-up.
    #   column W-2 duplicated by the replicate pad (+), column W-1 is the
    #   roll-wrap garbage (-).  No H x W weight map needed.
    col_sums = jnp.sum(jnp.sum(abs_dx, axis=0, keepdims=True),
                       axis=1, keepdims=True)                    # (1, 1, W)
    num_x = (jnp.sum(col_sums)
             + jnp.sum(col_sums[:, :, W - 2:W - 1])
             - jnp.sum(col_sums[:, :, W - 1:W]))

    # ---- y direction: per-row partial sums; remove the wrap-garbage last
    #   row, then add either the cross-tile seam diff (interior tiles, using
    #   the next tile's first row provided as a halo block) or the
    #   replicate-pad duplicate of row TH-2 (last tile).
    row_sums = jnp.sum(jnp.sum(abs_dy, axis=0, keepdims=True),
                       axis=2, keepdims=True)                    # (1, TH, 1)

    t = pl.program_id(1)
    is_last = t == pl.num_programs(1) - 1

    ref_last = ref_view[:, TH - 1:TH, :]                         # (Cv, 1, W)
    depth_last = depth[:, TH - 1:TH, :]                          # (Cd, 1, W)
    d_h = dhalo_ref[...].astype(jnp.float32)[:, 0:1, :]          # (Cd, 1, W)
    v_h = vhalo_ref[...].astype(jnp.float32)[:, 0:1, :]          # (Cv, 1, W)
    m_h = mhalo_ref[...].astype(jnp.float32)[:, 0:1, :]          # (1,  1, W)
    w_seam = jnp.exp(jnp.sum(jnp.abs(v_h * m_h - ref_last),
                             axis=0, keepdims=True) * inv_cv)    # (1, 1, W)
    seam_sum = jnp.sum(jnp.abs(w_seam * (d_h - depth_last)))
    dup_sum = jnp.sum(row_sums[:, TH - 2:TH - 1, :])

    num_y = (jnp.sum(row_sums)
             - jnp.sum(row_sums[:, TH - 1:TH, :])
             + jnp.where(is_last, dup_sum, seam_sum))

    num = num_x + num_y
    cnt = jnp.sum((mask > 0.5).astype(jnp.float32))

    # Lane-dense (8,128) partial block: sublane 0 carries the numerator,
    # sublanes 1..7 carry the mask count (one iota + one select per step).
    sub = jax.lax.broadcasted_iota(jnp.int32, (8, 128), 0)
    out_ref[...] = jnp.where(sub == 0, num, cnt)


def _row_tile_params(H, dtypes, row_tile):
    """Pick (row_tile, halo_rows) respecting dtype sublane packing."""
    min_itemsize = min(int(jnp.dtype(d).itemsize) for d in dtypes)
    row_align = 8 * max(1, 4 // max(1, min_itemsize))   # f32->8, bf16->16, i8->32
    if H % row_align != 0:
        return H, H            # single whole-image tile; "halo" block == full H
    if row_tile is None:
        best = row_align
        t = row_align
        while t <= min(H, 128):
            if H % t == 0:
                best = t
            t += row_align
        row_tile = best
    if row_tile % row_align != 0 or H % row_tile != 0:
        raise ValueError(
            f"row_tile={row_tile} must be a multiple of {row_align} dividing H={H}")
    return row_tile, row_align


def smoothness_loss_nocs(depth_maps, views, masks, *, row_tile=None):
    """depth_maps: (B, Cd, H, W); views: (B, V, Cv, H, W); masks: (B, V, 1, H, W)."""
    B, Cd, H, W = depth_maps.shape
    Bv, V, Cv, Hv, Wv = views.shape
    assert (Bv, Hv, Wv) == (B, H, W) and masks.shape == (B, V, 1, H, W)
    assert H >= 2 and W >= 2

    TH, HALO = _row_tile_params(
        H, (depth_maps.dtype, views.dtype, masks.dtype), row_tile)
    NT = H // TH
    THB = TH // HALO          # tile rows expressed in halo blocks
    HB = H // HALO            # number of halo blocks along H

    def _halo_blk(t):         # first rows of the NEXT tile (clamped on last tile)
        return jnp.minimum((t + 1) * THB, HB - 1)

    in_specs = [
        # main tiles: batch / view-0 / H-tile selection all in the BlockSpec
        pl.BlockSpec((None, Cd, TH, W), lambda b, t: (b, 0, t, 0)),
        pl.BlockSpec((None, None, Cv, TH, W), lambda b, t: (b, 0, 0, t, 0)),
        pl.BlockSpec((None, None, 1, TH, W), lambda b, t: (b, 0, 0, t, 0)),
        # small halo blocks (first rows of the next tile) for the d_y seam
        pl.BlockSpec((None, Cd, HALO, W), lambda b, t: (b, 0, _halo_blk(t), 0)),
        pl.BlockSpec((None, None, Cv, HALO, W), lambda b, t: (b, 0, 0, _halo_blk(t), 0)),
        pl.BlockSpec((None, None, 1, HALO, W), lambda b, t: (b, 0, 0, _halo_blk(t), 0)),
    ]
    out_spec = pl.BlockSpec((None, None, 8, 128), lambda b, t: (b, t, 0, 0))

    d_it = depth_maps.dtype.itemsize
    v_it = views.dtype.itemsize
    m_it = masks.dtype.itemsize
    row_bytes = W * (Cd * d_it + Cv * v_it + m_it)

    # Generation-aware VMEM limit: double-buffered blocks + f32 temporaries,
    # never more than 3/4 of physical VMEM (v7x only has 64 MiB per core).
    need = 2 * ((TH + HALO) * row_bytes + 8 * 128 * 4) \
        + 10 * (Cd + Cv) * TH * W * 4 + (4 << 20)
    try:
        cap = int(pltpu.get_tpu_info().vmem_capacity_bytes)
    except Exception:
        cap = 64 << 20
    vmem_limit = int(min(max(need, 32 << 20), (cap * 3) // 4))

    bytes_in = B * H * row_bytes + B * NT * HALO * row_bytes
    bytes_out = B * NT * 8 * 128 * 4
    flops = B * H * W * (12 * (Cd + Cv) + 8)

    # NOTE: with H-tiling the halo blocks are tiny; pipeline_mode=pl.Buffered(3)
    # on them could hide the per-step DMA latency, kept at default 2 to save VMEM.
    partials = pl.pallas_call(
        _smoothness_kernel,
        out_shape=jax.ShapeDtypeStruct((B, NT, 8, 128), jnp.float32),
        grid_spec=pltpu.PrefetchScalarGridSpec(
            num_scalar_prefetch=0,
            grid=(B, NT),
            in_specs=in_specs,
            out_specs=out_spec,
        ),
        compiler_params=pltpu.CompilerParams(
            dimension_semantics=("parallel", "parallel"),
            vmem_limit_bytes=vmem_limit,
        ),
        cost_estimate=pl.CostEstimate(
            flops=int(flops),
            transcendentals=int(2 * B * H * W),
            bytes_accessed=int(bytes_in + bytes_out),
        ),
    )(depth_maps, views, masks, depth_maps, views, masks)

    num_total = jnp.sum(partials[:, :, 0, 0])
    cnt_total = jnp.sum(partials[:, :, 1, 0])
    return num_total / (3.0 * cnt_total)


def _reference_loss(depth_maps, views, masks):
    """Pure-JAX reference mirroring the PyTorch code (computed in f32)."""
    depth_maps = depth_maps.astype(jnp.float32)
    views = views.astype(jnp.float32)
    masks = masks.astype(jnp.float32)
    mask = masks[:, 0]
    ref_view = views[:, 0] * mask
    dxi = ref_view[:, :, :, 1:] - ref_view[:, :, :, :-1]
    dyi = ref_view[:, :, 1:, :] - ref_view[:, :, :-1, :]
    wx = jnp.exp(-jnp.mean(jnp.abs(dxi), axis=1, keepdims=True))
    wy = jnp.exp(-jnp.mean(jnp.abs(dyi), axis=1, keepdims=True))
    dx = wx * (depth_maps[:, :, :, 1:] - depth_maps[:, :, :, :-1])
    dy = wy * (depth_maps[:, :, 1:, :] - depth_maps[:, :, :-1, :])
    dx = jnp.concatenate([dx, dx[:, :, :, -1:]], axis=3)   # replicate pad right
    dy = jnp.concatenate([dy, dy[:, :, -1:, :]], axis=2)   # replicate pad bottom
    num = jnp.sum(jnp.abs(dx)) + jnp.sum(jnp.abs(dy))
    den = 3.0 * jnp.sum((mask > 0.5).astype(jnp.float32))
    return num / den


if __name__ == "__main__":
    key = jax.random.PRNGKey(0)
    k1, k2, k3 = jax.random.split(key, 3)

    # Small but lane-/sublane-aligned spatial shape (real DRACO frames are
    # 480x640).  bf16 inputs halve the dominant HBM streams; the kernel
    # computes in f32 internally.
    B, Cd, H, W = 2, 1, 32, 128
    V, Cv = 2, 3

    depth_maps = (jax.random.uniform(k1, (B, Cd, H, W), jnp.float32) * 2.0
                  ).astype(jnp.bfloat16)
    views = jax.random.uniform(k2, (B, V, Cv, H, W), jnp.float32
                               ).astype(jnp.bfloat16)
    masks = (jax.random.uniform(k3, (B, V, 1, H, W), jnp.float32) > 0.3
             ).astype(jnp.bfloat16)

    # row_tile=16 -> 2 H-tiles per image, exercising the cross-tile seam path.
    loss = jax.block_until_ready(
        smoothness_loss_nocs(depth_maps, views, masks, row_tile=16))

    ref = _reference_loss(depth_maps, views, masks)
    assert jnp.allclose(loss, ref, rtol=1e-4, atol=1e-5), (loss, ref)

    print("KERNEL_OK")
</pallas_src>

<mosaic_0001>
module attributes {stable_mosaic.version = 11 : i64} {
  func.func @_smoothness_kernel(%arg0: i32, %arg1: i32, %arg2: memref<1x1x16x128xbf16, #tpu.memory_space<vmem>>, %arg3: memref<1x1x3x16x128xbf16, #tpu.memory_space<vmem>>, %arg4: memref<1x1x1x16x128xbf16, #tpu.memory_space<vmem>>, %arg5: memref<1x1x16x128xbf16, #tpu.memory_space<vmem>>, %arg6: memref<1x1x3x16x128xbf16, #tpu.memory_space<vmem>>, %arg7: memref<1x1x1x16x128xbf16, #tpu.memory_space<vmem>>, %arg8: memref<1x1x8x128xf32, #tpu.memory_space<vmem>>) attributes {dimension_semantics = [#tpu.dimension_semantics<parallel>, #tpu.dimension_semantics<parallel>], iteration_bounds = array<i64: 2, 2>, scalar_prefetch = 0 : i64, scratch_operands = 0 : i64, tpu.core_type = #tpu.core_type<tc>, window_params = [{transform_indices = @transform_0, window_bounds = array<i64: 1, 1, 16, 128>}, {transform_indices = @transform_1, window_bounds = array<i64: 1, 1, 3, 16, 128>}, {transform_indices = @transform_2, window_bounds = array<i64: 1, 1, 1, 16, 128>}, {transform_indices = @transform_3, window_bounds = array<i64: 1, 1, 16, 128>}, {transform_indices = @transform_4, window_bounds = array<i64: 1, 1, 3, 16, 128>}, {transform_indices = @transform_5, window_bounds = array<i64: 1, 1, 1, 16, 128>}, {transform_indices = @transform_6, window_bounds = array<i64: 1, 1, 8, 128>}]} {
    %c0 = arith.constant 0 : index
    %c0_0 = arith.constant 0 : index
    %c0_1 = arith.constant 0 : index
    %c0_2 = arith.constant 0 : index
    %0 = vector.load %arg2[%c0, %c0_0, %c0_1, %c0_2] : memref<1x1x16x128xbf16, #tpu.memory_space<vmem>>, vector<1x1x16x128xbf16>
    %1 = vector.shape_cast %0 : vector<1x1x16x128xbf16> to vector<1x16x128xbf16>
    %2 = arith.extf %1 : vector<1x16x128xbf16> to vector<1x16x128xf32>
    %c0_3 = arith.constant 0 : index
    %c0_4 = arith.constant 0 : index
    %c0_5 = arith.constant 0 : index
    %c0_6 = arith.constant 0 : index
    %c0_7 = arith.constant 0 : index
    %3 = vector.load %arg3[%c0_3, %c0_4, %c0_5, %c0_6, %c0_7] : memref<1x1x3x16x128xbf16, #tpu.memory_space<vmem>>, vector<1x1x3x16x128xbf16>
    %4 = vector.shape_cast %3 : vector<1x1x3x16x128xbf16> to vector<3x16x128xbf16>
    %5 = arith.extf %4 : vector<3x16x128xbf16> to vector<3x16x128xf32>
    %c0_8 = arith.constant 0 : index
    %c0_9 = arith.constant 0 : index
    %c0_10 = arith.constant 0 : index
    %c0_11 = arith.constant 0 : index
    %c0_12 = arith.constant 0 : index
    %6 = vector.load %arg4[%c0_8, %c0_9, %c0_10, %c0_11, %c0_12] : memref<1x1x1x16x128xbf16, #tpu.memory_space<vmem>>, vector<1x1x1x16x128xbf16>
    %7 = vector.shape_cast %6 : vector<1x1x1x16x128xbf16> to vector<1x16x128xbf16>
    %8 = arith.extf %7 : vector<1x16x128xbf16> to vector<1x16x128xf32>
    %9 = vector.broadcast %8 : vector<1x16x128xf32> to vector<3x16x128xf32>
    %10 = arith.mulf %5, %9 : vector<3x16x128xf32>
    %11 = tpu.concatenate %10, %2 in 0 : vector<3x16x128xf32>, vector<1x16x128xf32> -> vector<4x16x128xf32>
    %c127_i32 = arith.constant 127 : i32
    %12 = tpu.dynamic_rotate %11 by %c127_i32 dim 2 : vector<4x16x128xf32>, i32 -> vector<4x16x128xf32>
    %13 = arith.subf %12, %11 : vector<4x16x128xf32>
    %c15_i32 = arith.constant 15 : i32
    %14 = tpu.dynamic_rotate %11 by %c15_i32 dim 1 : vector<4x16x128xf32>, i32 -> vector<4x16x128xf32>
    %15 = arith.subf %14, %11 : vector<4x16x128xf32>
    %16 = vector.extract_strided_slice %13 {offsets = [0, 0, 0], sizes = [3, 16, 128], strides = [1, 1, 1]} : vector<4x16x128xf32> to vector<3x16x128xf32>
    %17 = math.absf %16 : vector<3x16x128xf32>
    %cst = arith.constant dense<0.000000e+00> : vector<16x128xf32>
    %18 = vector.multi_reduction <add>, %17, %cst [0] : vector<3x16x128xf32> to vector<16x128xf32>
    %19 = vector.shape_cast %18 : vector<16x128xf32> to vector<1x16x128xf32>
    %cst_13 = arith.constant -0.333333343 : f32
    %20 = vector.broadcast %cst_13 : f32 to vector<1x16x128xf32>
    %21 = arith.mulf %19, %20 : vector<1x16x128xf32>
    %22 = math.exp %21 : vector<1x16x128xf32>
    %23 = vector.extract_strided_slice %15 {offsets = [0, 0, 0], sizes = [3, 16, 128], strides = [1, 1, 1]} : vector<4x16x128xf32> to vector<3x16x128xf32>
    %24 = math.absf %23 : vector<3x16x128xf32>
    %cst_14 = arith.constant dense<0.000000e+00> : vector<16x128xf32>
    %25 = vector.multi_reduction <add>, %24, %cst_14 [0] : vector<3x16x128xf32> to vector<16x128xf32>
    %26 = vector.shape_cast %25 : vector<16x128xf32> to vector<1x16x128xf32>
    %cst_15 = arith.constant -0.333333343 : f32
    %27 = vector.broadcast %cst_15 : f32 to vector<1x16x128xf32>
    %28 = arith.mulf %26, %27 : vector<1x16x128xf32>
    %29 = math.exp %28 : vector<1x16x128xf32>
    %30 = vector.extract_strided_slice %13 {offsets = [3, 0, 0], sizes = [1, 16, 128], strides = [1, 1, 1]} : vector<4x16x128xf32> to vector<1x16x128xf32>
    %31 = arith.mulf %22, %30 : vector<1x16x128xf32>
    %32 = math.absf %31 : vector<1x16x128xf32>
    %33 = vector.extract_strided_slice %15 {offsets = [3, 0, 0], sizes = [1, 16, 128], strides = [1, 1, 1]} : vector<4x16x128xf32> to vector<1x16x128xf32>
    %34 = arith.mulf %29, %33 : vector<1x16x128xf32>
    %35 = math.absf %34 : vector<1x16x128xf32>
    %cst_16 = arith.constant dense<0.000000e+00> : vector<16x128xf32>
    %36 = vector.multi_reduction <add>, %32, %cst_16 [0] : vector<1x16x128xf32> to vector<16x128xf32>
    %37 = vector.shape_cast %36 : vector<16x128xf32> to vector<1x16x128xf32>
    %cst_17 = arith.constant dense<0.000000e+00> : vector<1x128xf32>
    %38 = vector.multi_reduction <add>, %37, %cst_17 [1] : vector<1x16x128xf32> to vector<1x128xf32>
    %39 = vector.shape_cast %38 : vector<1x128xf32> to vector<1x1x128xf32>
    %40 = vector.shape_cast %39 : vector<1x1x128xf32> to vector<1x1x1x128xf32>
    %cst_18 = arith.constant dense<0.000000e+00> : vector<1xf32>
    %41 = vector.multi_reduction <add>, %40, %cst_18 [1, 2, 3] : vector<1x1x1x128xf32> to vector<1xf32>
    %42 = vector.shape_cast %41 : vector<1xf32> to vector<1x1x1x1xf32>
    %43 = vector.extract %42[0, 0, 0, 0] : f32 from vector<1x1x1x1xf32>
    %44 = vector.extract_strided_slice %39 {offsets = [0, 0, 126], sizes = [1, 1, 1], strides = [1, 1, 1]} : vector<1x1x128xf32> to vector<1x1x1xf32>
    %45 = vector.shape_cast %44 : vector<1x1x1xf32> to vector<1x1x1x1xf32>
    %cst_19 = arith.constant dense<0.000000e+00> : vector<1xf32>
    %46 = vector.multi_reduction <add>, %45, %cst_19 [1, 2, 3] : vector<1x1x1x1xf32> to vector<1xf32>
    %47 = vector.shape_cast %46 : vector<1xf32> to vector<1x1x1x1xf32>
    %48 = vector.extract %47[0, 0, 0, 0] : f32 from vector<1x1x1x1xf32>
    %49 = arith.addf %43, %48 : f32
    %50 = vector.extract_strided_slice %39 {offsets = [0, 0, 127], sizes = [1, 1, 1], strides = [1, 1, 1]} : vector<1x1x128xf32> to vector<1x1x1xf32>
    %51 = vector.shape_cast %50 : vector<1x1x1xf32> to vector<1x1x1x1xf32>
    %cst_20 = arith.constant dense<0.000000e+00> : vector<1xf32>
    %52 = vector.multi_reduction <add>, %51, %cst_20 [1, 2, 3] : vector<1x1x1x1xf32> to vector<1xf32>
    %53 = vector.shape_cast %52 : vector<1xf32> to vector<1x1x1x1xf32>
    %54 = vector.extract %53[0, 0, 0, 0] : f32 from vector<1x1x1x1xf32>
    %55 = arith.subf %49, %54 : f32
    %cst_21 = arith.constant dense<0.000000e+00> : vector<16x128xf32>
    %56 = vector.multi_reduction <add>, %35, %cst_21 [0] : vector<1x16x128xf32> to vector<16x128xf32>
    %57 = vector.shape_cast %56 : vector<16x128xf32> to vector<1x16x128xf32>
    %cst_22 = arith.constant dense<0.000000e+00> : vector<1x16xf32>
    %58 = vector.multi_reduction <add>, %57, %cst_22 [2] : vector<1x16x128xf32> to vector<1x16xf32>
    %59 = vector.shape_cast %58 : vector<1x16xf32> to vector<1x16x1xf32>
    %c1_i32 = arith.constant 1 : i32
    %60 = arith.cmpi eq, %arg1, %c1_i32 : i32
    %61 = vector.extract_strided_slice %10 {offsets = [0, 15, 0], sizes = [3, 1, 128], strides = [1, 1, 1]} : vector<3x16x128xf32> to vector<3x1x128xf32>
    %62 = vector.extract_strided_slice %2 {offsets = [0, 15, 0], sizes = [1, 1, 128], strides = [1, 1, 1]} : vector<1x16x128xf32> to vector<1x1x128xf32>
    %c0_23 = arith.constant 0 : index
    %c0_24 = arith.constant 0 : index
    %c0_25 = arith.constant 0 : index
    %c0_26 = arith.constant 0 : index
    %63 = vector.load %arg5[%c0_23, %c0_24, %c0_25, %c0_26] : memref<1x1x16x128xbf16, #tpu.memory_space<vmem>>, vector<1x1x16x128xbf16>
    %64 = vector.shape_cast %63 : vector<1x1x16x128xbf16> to vector<1x16x128xbf16>
    %65 = arith.extf %64 : vector<1x16x128xbf16> to vector<1x16x128xf32>
    %66 = vector.extract_strided_slice %65 {offsets = [0, 0, 0], sizes = [1, 1, 128], strides = [1, 1, 1]} : vector<1x16x128xf32> to vector<1x1x128xf32>
    %c0_27 = arith.constant 0 : index
    %c0_28 = arith.constant 0 : index
    %c0_29 = arith.constant 0 : index
    %c0_30 = arith.constant 0 : index
    %c0_31 = arith.constant 0 : index
    %67 = vector.load %arg6[%c0_27, %c0_28, %c0_29, %c0_30, %c0_31] : memref<1x1x3x16x128xbf16, #tpu.memory_space<vmem>>, vector<1x1x3x16x128xbf16>
    %68 = vector.shape_cast %67 : vector<1x1x3x16x128xbf16> to vector<3x16x128xbf16>
    %69 = arith.extf %68 : vector<3x16x128xbf16> to vector<3x16x128xf32>
    %70 = vector.extract_strided_slice %69 {offsets = [0, 0, 0], sizes = [3, 1, 128], strides = [1, 1, 1]} : vector<3x16x128xf32> to vector<3x1x128xf32>
    %c0_32 = arith.constant 0 : index
    %c0_33 = arith.constant 0 : index
    %c0_34 = arith.constant 0 : index
    %c0_35 = arith.constant 0 : index
    %c0_36 = arith.constant 0 : index
    %71 = vector.load %arg7[%c0_32, %c0_33, %c0_34, %c0_35, %c0_36] : memref<1x1x1x16x128xbf16, #tpu.memory_space<vmem>>, vector<1x1x1x16x128xbf16>
    %72 = vector.shape_cast %71 : vector<1x1x1x16x128xbf16> to vector<1x16x128xbf16>
    %73 = arith.extf %72 : vector<1x16x128xbf16> to vector<1x16x128xf32>
    %74 = vector.extract_strided_slice %73 {offsets = [0, 0, 0], sizes = [1, 1, 128], strides = [1, 1, 1]} : vector<1x16x128xf32> to vector<1x1x128xf32>
    %75 = vector.broadcast %74 : vector<1x1x128xf32> to vector<3x1x128xf32>
    %76 = arith.mulf %70, %75 : vector<3x1x128xf32>
    %77 = arith.subf %76, %61 : vector<3x1x128xf32>
    %78 = math.absf %77 : vector<3x1x128xf32>
    %cst_37 = arith.constant dense<0.000000e+00> : vector<1x128xf32>
    %79 = vector.multi_reduction <add>, %78, %cst_37 [0] : vector<3x1x128xf32> to vector<1x128xf32>
    %80 = vector.shape_cast %79 : vector<1x128xf32> to vector<1x1x128xf32>
    %cst_38 = arith.constant -0.333333343 : f32
    %81 = vector.broadcast %cst_38 : f32 to vector<1x1x128xf32>
    %82 = arith.mulf %80, %81 : vector<1x1x128xf32>
    %83 = math.exp %82 : vector<1x1x128xf32>
    %84 = arith.subf %66, %62 : vector<1x1x128xf32>
    %85 = arith.mulf %83, %84 : vector<1x1x128xf32>
    %86 = math.absf %85 : vector<1x1x128xf32>
    %87 = vector.shape_cast %86 : vector<1x1x128xf32> to vector<1x1x1x128xf32>
    %cst_39 = arith.constant dense<0.000000e+00> : vector<1xf32>
    %88 = vector.multi_reduction <add>, %87, %cst_39 [1, 2, 3] : vector<1x1x1x128xf32> to vector<1xf32>
    %89 = vector.shape_cast %88 : vector<1xf32> to vector<1x1x1x1xf32>
    %90 = vector.extract %89[0, 0, 0, 0] : f32 from vector<1x1x1x1xf32>
    %91 = vector.extract_strided_slice %59 {offsets = [0, 14, 0], sizes = [1, 1, 1], strides = [1, 1, 1]} : vector<1x16x1xf32> to vector<1x1x1xf32>
    %92 = vector.shape_cast %91 : vector<1x1x1xf32> to vector<1x1x1x1xf32>
    %cst_40 = arith.constant dense<0.000000e+00> : vector<1xf32>
    %93 = vector.multi_reduction <add>, %92, %cst_40 [1, 2, 3] : vector<1x1x1x1xf32> to vector<1xf32>
    %94 = vector.shape_cast %93 : vector<1xf32> to vector<1x1x1x1xf32>
    %95 = vector.extract %94[0, 0, 0, 0] : f32 from vector<1x1x1x1xf32>
    %96 = vector.shape_cast %59 : vector<1x16x1xf32> to vector<1x1x16x1xf32>
    %cst_41 = arith.constant dense<0.000000e+00> : vector<1xf32>
    %97 = vector.multi_reduction <add>, %96, %cst_41 [1, 2, 3] : vector<1x1x16x1xf32> to vector<1xf32>
    %98 = vector.shape_cast %97 : vector<1xf32> to vector<1x1x1x1xf32>
    %99 = vector.extract %98[0, 0, 0, 0] : f32 from vector<1x1x1x1xf32>
    %100 = vector.extract_strided_slice %59 {offsets = [0, 15, 0], sizes = [1, 1, 1], strides = [1, 1, 1]} : vector<1x16x1xf32> to vector<1x1x1xf32>
    %101 = vector.shape_cast %100 : vector<1x1x1xf32> to vector<1x1x1x1xf32>
    %cst_42 = arith.constant dense<0.000000e+00> : vector<1xf32>
    %102 = vector.multi_reduction <add>, %101, %cst_42 [1, 2, 3] : vector<1x1x1x1xf32> to vector<1xf32>
    %103 = vector.shape_cast %102 : vector<1xf32> to vector<1x1x1x1xf32>
    %104 = vector.extract %103[0, 0, 0, 0] : f32 from vector<1x1x1x1xf32>
    %105 = arith.subf %99, %104 : f32
    %106 = arith.select %60, %95, %90 : f32
    %107 = arith.addf %105, %106 : f32
    %108 = arith.addf %55, %107 : f32
    %cst_43 = arith.constant 5.000000e-01 : f32
    %109 = vector.broadcast %cst_43 : f32 to vector<1x16x128xf32>
    %110 = arith.cmpf ogt, %8, %109 : vector<1x16x128xf32>
    %111 = arith.extui %110 : vector<1x16x128xi1> to vector<1x16x128xi32>
    %112 = arith.sitofp %111 : vector<1x16x128xi32> to vector<1x16x128xf32>
    %113 = vector.shape_cast %112 : vector<1x16x128xf32> to vector<1x1x16x128xf32>
    %cst_44 = arith.constant dense<0.000000e+00> : vector<1xf32>
    %114 = vector.multi_reduction <add>, %113, %cst_44 [1, 2, 3] : vector<1x1x16x128xf32> to vector<1xf32>
    %115 = vector.shape_cast %114 : vector<1xf32> to vector<1x1x1x1xf32>
    %116 = vector.extract %115[0, 0, 0, 0] : f32 from vector<1x1x1x1xf32>
    %117 = tpu.iota {dimensions = array<i32: 0>} : vector<8x128xi32>
    %c0_i32 = arith.constant 0 : i32
    %118 = vector.broadcast %c0_i32 : i32 to vector<8x128xi32>
    %119 = arith.cmpi eq, %117, %118 : vector<8x128xi32>
    %120 = vector.broadcast %108 : f32 to vector<8x128xf32>
    %121 = vector.broadcast %116 : f32 to vector<8x128xf32>
    %122 = arith.select %119, %120, %121 : vector<8x128xi1>, vector<8x128xf32>
    %c0_45 = arith.constant 0 : index
    %c0_46 = arith.constant 0 : index
    %c0_47 = arith.constant 0 : index
    %c0_48 = arith.constant 0 : index
    %123 = vector.load %arg8[%c0_45, %c0_46, %c0_47, %c0_48] : memref<1x1x8x128xf32, #tpu.memory_space<vmem>>, vector<1x1x8x128xf32>
    %124 = vector.shape_cast %123 : vector<1x1x8x128xf32> to vector<8x128xf32>
    %125 = vector.shape_cast %122 : vector<8x128xf32> to vector<1x1x8x128xf32>
    tpu.vector_store %arg8[%c0_45, %c0_46, %c0_47, %c0_48], %125 {strides = array<i32>} : memref<1x1x8x128xf32, #tpu.memory_space<vmem>>, vector<1x1x8x128xf32>,
    return
  }
  func.func @transform_0(%arg0: i32, %arg1: i32) -> (i32, i32, i32, i32) {
    %c0_i32 = arith.constant 0 : i32
    %c0_i32_0 = arith.constant 0 : i32
    %c0_i32_1 = arith.constant 0 : i32
    return %arg0, %c0_i32, %arg1, %c0_i32_0 : i32, i32, i32, i32
  }
  func.func @transform_1(%arg0: i32, %arg1: i32) -> (i32, i32, i32, i32, i32) {
    %c0_i32 = arith.constant 0 : i32
    %c0_i32_0 = arith.constant 0 : i32
    %c0_i32_1 = arith.constant 0 : i32
    %c0_i32_2 = arith.constant 0 : i32
    return %arg0, %c0_i32, %c0_i32_0, %arg1, %c0_i32_1 : i32, i32, i32, i32, i32
  }
  func.func @transform_2(%arg0: i32, %arg1: i32) -> (i32, i32, i32, i32, i32) {
    %c0_i32 = arith.constant 0 : i32
    %c0_i32_0 = arith.constant 0 : i32
    %c0_i32_1 = arith.constant 0 : i32
    %c0_i32_2 = arith.constant 0 : i32
    return %arg0, %c0_i32, %c0_i32_0, %arg1, %c0_i32_1 : i32, i32, i32, i32, i32
  }
  func.func @transform_3(%arg0: i32, %arg1: i32) -> (i32, i32, i32, i32) {
    %c1_i32 = arith.constant 1 : i32
    %0 = arith.addi %arg1, %c1_i32 : i32
    %c1_i32_0 = arith.constant 1 : i32
    %1 = arith.muli %0, %c1_i32_0 : i32
    %c1_i32_1 = arith.constant 1 : i32
    %2 = arith.minsi %1, %c1_i32_1 : i32
    %c0_i32 = arith.constant 0 : i32
    %c0_i32_2 = arith.constant 0 : i32
    %c0_i32_3 = arith.constant 0 : i32
    return %arg0, %c0_i32, %2, %c0_i32_2 : i32, i32, i32, i32
  }
  func.func @transform_4(%arg0: i32, %arg1: i32) -> (i32, i32, i32, i32, i32) {
    %c1_i32 = arith.constant 1 : i32
    %0 = arith.addi %arg1, %c1_i32 : i32
    %c1_i32_0 = arith.constant 1 : i32
    %1 = arith.muli %0, %c1_i32_0 : i32
    %c1_i32_1 = arith.constant 1 : i32
    %2 = arith.minsi %1, %c1_i32_1 : i32
    %c0_i32 = arith.constant 0 : i32
    %c0_i32_2 = arith.constant 0 : i32
    %c0_i32_3 = arith.constant 0 : i32
    %c0_i32_4 = arith.constant 0 : i32
    return %arg0, %c0_i32, %c0_i32_2, %2, %c0_i32_3 : i32, i32, i32, i32, i32
  }
  func.func @transform_5(%arg0: i32, %arg1: i32) -> (i32, i32, i32, i32, i32) {
    %c1_i32 = arith.constant 1 : i32
    %0 = arith.addi %arg1, %c1_i32 : i32
    %c1_i32_0 = arith.constant 1 : i32
    %1 = arith.muli %0, %c1_i32_0 : i32
    %c1_i32_1 = arith.constant 1 : i32
    %2 = arith.minsi %1, %c1_i32_1 : i32
    %c0_i32 = arith.constant 0 : i32
    %c0_i32_2 = arith.constant 0 : i32
    %c0_i32_3 = arith.constant 0 : i32
    %c0_i32_4 = arith.constant 0 : i32
    return %arg0, %c0_i32, %c0_i32_2, %2, %c0_i32_3 : i32, i32, i32, i32, i32
  }
  func.func @transform_6(%arg0: i32, %arg1: i32) -> (i32, i32, i32, i32) {
    %c0_i32 = arith.constant 0 : i32
    %c0_i32_0 = arith.constant 0 : i32
    %c0_i32_1 = arith.constant 0 : i32
    return %arg0, %arg1, %c0_i32, %c0_i32_0 : i32, i32, i32, i32
  }
}

</mosaic_0001>

<llo_original>
// kernel: tpu_custom_call.1
$region0: #{tpu_custom_call.1}
  #allocation0 [shape = 'u32[]', space=smem, size = 0x4, offset = 0x4, fixed_abs, tag = 'smem constant byte address 0x4 - core index']
  #allocation1 [shape = 'u32[144,128]{1,0:T(1,128)}', space=vmem, size = 0x12000, scoped, tag = 'internal scratch']
  #allocation14 [shape = 's32[]', space=sflag, size = 0x4, offset = 0, fixed_abs, tag = 'sflag constant byte address 0x0 - dummy sync flag']
  #allocation16 [shape = 's32[]', space=sflag, size = 0x4, offset = 0, fixed_abs, tag = 'sflag constant byte address 0x0 - dummy sync flag']
  %s0 = inlined_call_operand.hbm [shape: bf16[2,1,32,128], index: 0, kind: input, shape index: {}]
  %s1 = inlined_call_operand.hbm [shape: bf16[2,2,3,32,128], index: 1, kind: input, shape index: {}]
  %s2 = inlined_call_operand.hbm [shape: bf16[2,2,1,32,128], index: 2, kind: input, shape index: {}]
  %s3 = inlined_call_operand.hbm [shape: bf16[2,1,32,128], index: 3, kind: input, shape index: {}]
  %s4 = inlined_call_operand.hbm [shape: bf16[2,2,3,32,128], index: 4, kind: input, shape index: {}]
  %s5 = inlined_call_operand.hbm [shape: bf16[2,2,1,32,128], index: 5, kind: input, shape index: {}]
  %s6 = inlined_call_operand.hbm [shape: f32[2,2,8,128], index: 6, kind: output, shape index: {}]
  %s7 = sld [smem:[#allocation0]]
  $region81: #{tpu_custom_call.1} parent=0
    _
  %s9 = ssub.s32 1, %s7
  %s10 = scalar_select 0, %s9, %s7
  $region1: #{tpu_custom_call.1} parent=0
    #allocation2 [shape = 'u8[8192]{0}', space=vmem, size = 0x2000, scoped, tag = 'input window, operand 0']
    #allocation3 [shape = 's32[2]{0}', space=sflag, size = 0x8, scoped, tag = 'scoped memory for tpu_custom_call.1']
    #allocation4 [shape = 's32[2]{0}', space=sflag, size = 0x8, scoped, tag = 'scoped memory for tpu_custom_call.1']
    #allocation5 [shape = 'u8[24576]{0}', space=vmem, size = 0x6000, scoped, tag = 'input window, operand 1']
    #allocation6 [shape = 's32[2]{0}', space=sflag, size = 0x8, scoped, tag = 'scoped memory for tpu_custom_call.1']
    #allocation7 [shape = 'u8[8192]{0}', space=vmem, size = 0x2000, scoped, tag = 'input window, operand 2']
    #allocation8 [shape = 'u8[8192]{0}', space=vmem, size = 0x2000, scoped, tag = 'input window, operand 3']
    #allocation9 [shape = 's32[2]{0}', space=sflag, size = 0x8, scoped, tag = 'scoped memory for tpu_custom_call.1']
    #allocation10 [shape = 'u8[24576]{0}', space=vmem, size = 0x6000, scoped, tag = 'input window, operand 4']
    #allocation11 [shape = 'u8[8192]{0}', space=vmem, size = 0x2000, scoped, tag = 'input window, operand 5']
    #allocation12 [shape = 's32[2]{0}', space=sflag, size = 0x8, scoped, tag = 'scoped memory for tpu_custom_call.1']
    #allocation13 [shape = 'u8[8192]{0}', space=vmem, size = 0x2000, scoped, tag = 'output window, operand 0']
    %11 = vsyncpa [#allocation3], 0
    %s12 = scalar_lea.sflag [#allocation3], 1
    %13 = vsyncpa %s12, 0
    %14 = vsyncpa [#allocation6], 0
    %s15 = scalar_lea.sflag [#allocation6], 1
    %16 = vsyncpa %s15, 0
    %17 = vsyncpa [#allocation9], 0
    %s18 = scalar_lea.sflag [#allocation9], 1
    %19 = vsyncpa %s18, 0
    %20 = vsyncpa [#allocation12], 0
    %s21 = scalar_lea.sflag [#allocation12], 1
    %22 = vsyncpa %s21, 0
    %23 = vsyncpa [#allocation4], 0
    %s24 = scalar_lea.sflag [#allocation4], 1
    %25 = vsyncpa %s24, 0
    loop: start=0, step=1, limit=6
    $region2: #{tpu_custom_call.1} parent=1 // loop_pre_header
      _
    $region3: #{tpu_custom_call.1} parent=1 // loop_header
      %s27 = sphi 0, %s31
      %p28 = scmp.ge.s32.totalorder %s27, 6
      %s34 = sphi 0, %s46
      %s35 = sphi 0, %s42
      %s36 = sphi 0, %s34
      %s37 = sphi 0, %s35
      %s38 = sphi 0, %s36
      %s39 = sphi 0, %s37
      %s51 = sphi 0, %s53
      %s54 = sphi 0, %s51
      %s55 = sphi 0, %s54
      %s71 = sphi 0, %s55
      %s79 = sphi 0, %s81
      %s82 = sphi 0, %s79
      %s83 = sphi 0, %s82
      %s99 = sphi 0, %s83
      %s107 = sphi 0, %s109
      %s110 = sphi 0, %s107
      %s111 = sphi 0, %s110
      %s127 = sphi 0, %s111
      %s141 = sphi 0, %s143
      %s144 = sphi 0, %s141
      %s145 = sphi 0, %s144
      %s161 = sphi 0, %s145
      %s175 = sphi 0, %s177
      %s178 = sphi 0, %s175
      %s179 = sphi 0, %s178
      %s195 = sphi 0, %s179
      %s209 = sphi 0, %s211
      %s212 = sphi 0, %s209
      %s213 = sphi 0, %s212
      %s229 = sphi 0, %s213
      %s237 = sphi 0, %s239
      %s240 = sphi 0, %s237
      %s241 = sphi 0, %s240
      %s257 = sphi 0, %s241
    $region4: #{tpu_custom_call.1} parent=1 // loop_header_branch
      %30 = sbr.rel (%p28) target = $region8
    $region5: #{tpu_custom_call.1} parent=1 // loop_body
      %s32 = ssub.s32 %s27, 1
      %s33 = ssub.s32 %s27, 2
      %s40 = sadd.s32 1, %s35
      %p41 = scmp.ge.s32.totalorder %s40, 2
      %s42 = scalar_select %p41, 0, %s40
      %s43 = sadd.s32 1, %s34
      %s44 = scalar_select %p41, %s43, %s34
      %p45 = scmp.ge.s32.totalorder %s44, 2
      %s46 = scalar_select %p45, 0, %s44
      %s47 = ssub.s32 %s34, %s46
      %s48 = ssub.s32 %s35, %s42
      %s49 = sor.u32 %s47, %s48
      %p50 = scmp.eq.s32.totalorder %s49, 0
      %s52 = sadd.s32 %s51, 1
      %s53 = scalar_select %p50, %s51, %s52
      %p56 = pneg %p50
      %p57 = scmp.eq.s32.totalorder %s27, 3
      %p58 = por %p56, %p57
      %p59 = scmp.ne.s32.totalorder %s51, %s54
      %p60 = scmp.eq.s32.totalorder %s27, 0
      %p61 = por %p59, %p60
      %p62 = scmp.ne.s32.totalorder %s51, %s54
      %p63 = scmp.eq.s32.totalorder %s32, 3
      %p64 = por %p62, %p63
      %p65 = scmp.ne.s32.totalorder %s54, %s55
      %p66 = scmp.eq.s32.totalorder %s32, 0
      %p67 = por %p65, %p66
      %p68 = scmp.ne.s32.totalorder %s54, %s55
      %p69 = scmp.eq.s32.totalorder %s33, 3
      %p70 = por %p68, %p69
      %p72 = scmp.ne.s32.totalorder %s55, %s71
      %p73 = scmp.eq.s32.totalorder %s33, 0
      %p74 = por %p72, %p73
      %s75 = ssub.s32 %s34, %s46
      %s76 = ssub.s32 %s35, %s42
      %s77 = sor.u32 %s75, %s76
      %p78 = scmp.eq.s32.totalorder %s77, 0
      %s80 = sadd.s32 %s79, 1
      %s81 = scalar_select %p78, %s79, %s80
      %p84 = pneg %p78
      %p85 = scmp.eq.s32.totalorder %s27, 3
      %p86 = por %p84, %p85
      %p87 = scmp.ne.s32.totalorder %s79, %s82
      %p88 = scmp.eq.s32.totalorder %s27, 0
      %p89 = por %p87, %p88
      %p90 = scmp.ne.s32.totalorder %s79, %s82
      %p91 = scmp.eq.s32.totalorder %s32, 3
      %p92 = por %p90, %p91
      %p93 = scmp.ne.s32.totalorder %s82, %s83
      %p94 = scmp.eq.s32.totalorder %s32, 0
      %p95 = por %p93, %p94
      %p96 = scmp.ne.s32.totalorder %s82, %s83
      %p97 = scmp.eq.s32.totalorder %s33, 3
      %p98 = por %p96, %p97
      %p100 = scmp.ne.s32.totalorder %s83, %s99
      %p101 = scmp.eq.s32.totalorder %s33, 0
      %p102 = por %p100, %p101
      %s103 = ssub.s32 %s34, %s46
      %s104 = ssub.s32 %s35, %s42
      %s105 = sor.u32 %s103, %s104
      %p106 = scmp.eq.s32.totalorder %s105, 0
      %s108 = sadd.s32 %s107, 1
      %s109 = scalar_select %p106, %s107, %s108
      %p112 = pneg %p106
      %p113 = scmp.eq.s32.totalorder %s27, 3
      %p114 = por %p112, %p113
      %p115 = scmp.ne.s32.totalorder %s107, %s110
      %p116 = scmp.eq.s32.totalorder %s27, 0
      %p117 = por %p115, %p116
      %p118 = scmp.ne.s32.totalorder %s107, %s110
      %p119 = scmp.eq.s32.totalorder %s32, 3
      %p120 = por %p118, %p119
      %p121 = scmp.ne.s32.totalorder %s110, %s111
      %p122 = scmp.eq.s32.totalorder %s32, 0
      %p123 = por %p121, %p122
      %p124 = scmp.ne.s32.totalorder %s110, %s111
      %p125 = scmp.eq.s32.totalorder %s33, 3
      %p126 = por %p124, %p125
      %p128 = scmp.ne.s32.totalorder %s111, %s127
      %p129 = scmp.eq.s32.totalorder %s33, 0
      %p130 = por %p128, %p129
      %s131 = sadd.s32 %s35, 1
      %p132 = scmp.lt.s32.totalorder %s131, 1
      %s133 = scalar_select %p132, %s131, 1
      %s134 = sadd.s32 %s42, 1
      %p135 = scmp.lt.s32.totalorder %s134, 1
      %s136 = scalar_select %p135, %s134, 1
      %s137 = ssub.s32 %s34, %s46
      %s138 = ssub.s32 %s133, %s136
      %s139 = sor.u32 %s137, %s138
      %p140 = scmp.eq.s32.totalorder %s139, 0
      %s142 = sadd.s32 %s141, 1
      %s143 = scalar_select %p140, %s141, %s142
      %p146 = pneg %p140
      %p147 = scmp.eq.s32.totalorder %s27, 3
      %p148 = por %p146, %p147
      %p149 = scmp.ne.s32.totalorder %s141, %s144
      %p150 = scmp.eq.s32.totalorder %s27, 0
      %p151 = por %p149, %p150
      %p152 = scmp.ne.s32.totalorder %s141, %s144
      %p153 = scmp.eq.s32.totalorder %s32, 3
      %p154 = por %p152, %p153
      %p155 = scmp.ne.s32.totalorder %s144, %s145
      %p156 = scmp.eq.s32.totalorder %s32, 0
      %p157 = por %p155, %p156
      %p158 = scmp.ne.s32.totalorder %s144, %s145
      %p159 = scmp.eq.s32.totalorder %s33, 3
      %p160 = por %p158, %p159
      %p162 = scmp.ne.s32.totalorder %s145, %s161
      %p163 = scmp.eq.s32.totalorder %s33, 0
      %p164 = por %p162, %p163
      %s165 = sadd.s32 %s35, 1
      %p166 = scmp.lt.s32.totalorder %s165, 1
      %s167 = scalar_select %p166, %s165, 1
      %s168 = sadd.s32 %s42, 1
      %p169 = scmp.lt.s32.totalorder %s168, 1
      %s170 = scalar_select %p169, %s168, 1
      %s171 = ssub.s32 %s34, %s46
      %s172 = ssub.s32 %s167, %s170
      %s173 = sor.u32 %s171, %s172
      %p174 = scmp.eq.s32.totalorder %s173, 0
      %s176 = sadd.s32 %s175, 1
      %s177 = scalar_select %p174, %s175, %s176
      %p180 = pneg %p174
      %p181 = scmp.eq.s32.totalorder %s27, 3
      %p182 = por %p180, %p181
      %p183 = scmp.ne.s32.totalorder %s175, %s178
      %p184 = scmp.eq.s32.totalorder %s27, 0
      %p185 = por %p183, %p184
      %p186 = scmp.ne.s32.totalorder %s175, %s178
      %p187 = scmp.eq.s32.totalorder %s32, 3
      %p188 = por %p186, %p187
      %p189 = scmp.ne.s32.totalorder %s178, %s179
      %p190 = scmp.eq.s32.totalorder %s32, 0
      %p191 = por %p189, %p190
      %p192 = scmp.ne.s32.totalorder %s178, %s179
      %p193 = scmp.eq.s32.totalorder %s33, 3
      %p194 = por %p192, %p193
      %p196 = scmp.ne.s32.totalorder %s179, %s195
      %p197 = scmp.eq.s32.totalorder %s33, 0
      %p198 = por %p196, %p197
      %s199 = sadd.s32 %s35, 1
      %p200 = scmp.lt.s32.totalorder %s199, 1
      %s201 = scalar_select %p200, %s199, 1
      %s202 = sadd.s32 %s42, 1
      %p203 = scmp.lt.s32.totalorder %s202, 1
      %s204 = scalar_select %p203, %s202, 1
      %s205 = ssub.s32 %s34, %s46
      %s206 = ssub.s32 %s201, %s204
      %s207 = sor.u32 %s205, %s206
      %p208 = scmp.eq.s32.totalorder %s207, 0
      %s210 = sadd.s32 %s209, 1
      %s211 = scalar_select %p208, %s209, %s210
      %p214 = pneg %p208
      %p215 = scmp.eq.s32.totalorder %s27, 3
      %p216 = por %p214, %p215
      %p217 = scmp.ne.s32.totalorder %s209, %s212
      %p218 = scmp.eq.s32.totalorder %s27, 0
      %p219 = por %p217, %p218
      %p220 = scmp.ne.s32.totalorder %s209, %s212
      %p221 = scmp.eq.s32.totalorder %s32, 3
      %p222 = por %p220, %p221
      %p223 = scmp.ne.s32.totalorder %s212, %s213
      %p224 = scmp.eq.s32.totalorder %s32, 0
      %p225 = por %p223, %p224
      %p226 = scmp.ne.s32.totalorder %s212, %s213
      %p227 = scmp.eq.s32.totalorder %s33, 3
      %p228 = por %p226, %p227
      %p230 = scmp.ne.s32.totalorder %s213, %s229
      %p231 = scmp.eq.s32.totalorder %s33, 0
      %p232 = por %p230, %p231
      %s233 = ssub.s32 %s34, %s46
      %s234 = ssub.s32 %s35, %s42
      %s235 = sor.u32 %s233, %s234
      %p236 = scmp.eq.s32.totalorder %s235, 0
      %s238 = sadd.s32 %s237, 1
      %s239 = scalar_select %p236, %s237, %s238
      %p242 = pneg %p236
      %p243 = scmp.eq.s32.totalorder %s27, 3
      %p244 = por %p242, %p243
      %p245 = scmp.ne.s32.totalorder %s237, %s240
      %p246 = scmp.eq.s32.totalorder %s27, 0
      %p247 = por %p245, %p246
      %p248 = scmp.ne.s32.totalorder %s237, %s240
      %p249 = scmp.eq.s32.totalorder %s32, 3
      %p250 = por %p248, %p249
      %p251 = scmp.ne.s32.totalorder %s240, %s241
      %p252 = scmp.eq.s32.totalorder %s32, 0
      %p253 = por %p251, %p252
      %p254 = scmp.ne.s32.totalorder %s240, %s241
      %p255 = scmp.eq.s32.totalorder %s33, 3
      %p256 = por %p254, %p255
      %p258 = scmp.ne.s32.totalorder %s241, %s257
      %p259 = scmp.eq.s32.totalorder %s33, 0
      %p260 = por %p258, %p259
      %p261 = scmp.le.s32.totalorder 1, %s27
      %p262 = scmp.lt.s32.totalorder %s27, 5
      %p263 = pnand %p261, %p262
      %p264 = pneg %p263
      // Predicated region
      $region9: #{tpu_custom_call.1} parent=5 // pred_check
        _
      $region10: #{tpu_custom_call.1} parent=5 // pred_check_branch
        %266 = sbr.rel (%p263) target = $region12
      $region11: #{tpu_custom_call.1} parent=5 // pred_region
        %s267 = ssub.s32 %s27, 1
      $region12: #{tpu_custom_call.1} parent=5 // pred_fallthru
        _
      %p268 = scmp.lt.s32.totalorder %s27, 4
      // Predicated region
      $region13: #{tpu_custom_call.1} parent=5 // pred_check
        %p269 = pneg %p268
      $region14: #{tpu_custom_call.1} parent=5 // pred_check_branch
        %271 = sbr.rel (%p269) target = $region16
      $region15: #{tpu_custom_call.1} parent=5 // pred_region
        // Predicated region
        $region17: #{tpu_custom_call.1} parent=15 // pred_check
          %p272 = pneg %p61
        $region18: #{tpu_custom_call.1} parent=15 // pred_check_branch
          %274 = sbr.rel (%p272) target = $region20
        $region19: #{tpu_custom_call.1} parent=15 // pred_region
          %s275 = sand.u32 %s51, 1
          %s276 = scalar_lea.sflag [#allocation3], %s275
          %s277 = sand.u32 %s51, 1
          %s278 = smul.addr %s277, 8
          %s279 = scalar_lea.vmem [#allocation2], %s278
          %s280 = smul.u32 2, %s35
          %s282 = ssub.s32 128, 128
          %283 = vsyncadd %s276, %s282
          %s284 = smul.addr %s34, 4
          %s285 = sadd.s32 %s280, %s284
          %s286 = smul.addr %s285, 64
          %s287 = scalar_lea.hbm %s0, %s286
          %s288 = sshll.u32 %s279, 4
          %s289 = int_to_ptr.vmem [resolvable:$true] %s288
          %294 = dma.hbm_to_vmem [thread:$0]  %s287, 128, %s289, %s276, 64, 64, 4
        $region20: #{tpu_custom_call.1} parent=15 // pred_fallthru
          _
        // Predicated region
        $region21: #{tpu_custom_call.1} parent=15 // pred_check
          %p295 = pneg %p89
        $region22: #{tpu_custom_call.1} parent=15 // pred_check_branch
          %297 = sbr.rel (%p295) target = $region24
        $region23: #{tpu_custom_call.1} parent=15 // pred_region
          #allocation15 [shape = 'u32[6]{0}', space=smem, size = 0x18, scoped, tag = 'DMA stride descriptor']
          %s298 = sand.u32 %s27, 1
          %s299 = scalar_lea.sflag [#allocation6], %s298
          %s300 = sand.u32 %s79, 1
          %s301 = smul.addr %s300, 24
          %s302 = scalar_lea.vmem [#allocation5], %s301
          %s303 = smul.u32 2, %s35
          %s305 = ssub.s32 384, 384
          %306 = vsyncadd %s299, %s305
          %s307 = smul.addr %s34, 24
          %s308 = sadd.s32 %s303, %s307
          %s309 = smul.addr %s308, 64
          %s310 = scalar_lea.hbm %s1, %s309
          %s312 = sshll.u32 1, 14
          %s313 = sxor.u32 4294967295, %s312
          %s315 = sld [smem:[#allocation0]]
          %s316 = sadd.s32 2, %s315
          %s318 = sshll.u32 7, 26
          %s319 = sxor.u32 4294967295, %s318
          %s320 = sand.u32 0, %s319
          %s321 = sshll.u32 %s316, 26
          %s322 = sor.u32 %s320, %s321
          %s323 = sshll.u32 %s302, 4
          %s324 = int_to_ptr.vmem [resolvable:$true] %s323
          %330 = sst [smem:[#allocation15]] 256
          %s331 = scalar_lea.smem [#allocation15], 1
          %332 = sst [smem:[%s331]] 128
          %s333 = scalar_lea.smem [#allocation15], 2
          %334 = sst [smem:[%s333]] 2
          %s335 = scalar_lea.smem [#allocation15], 3
          %336 = sst [smem:[%s335]] 64
          %s337 = scalar_lea.smem [#allocation15], 4
          %338 = sst [smem:[%s337]] 64
          %s339 = scalar_lea.smem [#allocation15], 5
          %340 = sst [smem:[%s339]] 4
          %342 = dma.general %s310, 384, %s324, %s299, [#allocation14], [#allocation15], %s322, 0
        $region24: #{tpu_custom_call.1} parent=15 // pred_fallthru
          _
        // Predicated region
        $region25: #{tpu_custom_call.1} parent=15 // pred_check
          %p343 = pneg %p117
        $region26: #{tpu_custom_call.1} parent=15 // pred_check_branch
          %345 = sbr.rel (%p343) target = $region28
        $region27: #{tpu_custom_call.1} parent=15 // pred_region
          %s346 = sand.u32 %s27, 1
          %s347 = scalar_lea.sflag [#allocation6], %s346
          %s348 = sand.u32 %s107, 1
          %s349 = smul.addr %s348, 8
          %s350 = scalar_lea.vmem [#allocation7], %s349
          %s351 = smul.u32 2, %s35
          %s353 = ssub.s32 128, 128
          %354 = vsyncadd %s347, %s353
          %s355 = smul.addr %s34, 8
          %s356 = sadd.s32 %s351, %s355
          %s357 = smul.addr %s356, 64
          %s358 = scalar_lea.hbm %s2, %s357
          %s359 = sshll.u32 %s350, 4
          %s360 = int_to_ptr.vmem [resolvable:$true] %s359
          %365 = dma.hbm_to_vmem [thread:$0]  %s358, 128, %s360, %s347, 64, 64, 4
        $region28: #{tpu_custom_call.1} parent=15 // pred_fallthru
          _
        // Predicated region
        $region29: #{tpu_custom_call.1} parent=15 // pred_check
          %p366 = pneg %p151
        $region30: #{tpu_custom_call.1} parent=15 // pred_check_branch
          %368 = sbr.rel (%p366) target = $region32
        $region31: #{tpu_custom_call.1} parent=15 // pred_region
          %s369 = sand.u32 %s27, 1
          %s370 = scalar_lea.sflag [#allocation9], %s369
          %s371 = sand.u32 %s141, 1
          %s372 = smul.addr %s371, 8
          %s373 = scalar_lea.vmem [#allocation8], %s372
          %s374 = sadd.s32 %s35, 1
          %p375 = scmp.lt.s32.totalorder %s374, 1
          %s376 = scalar_select %p375, %s374, 1
          %s377 = smul.u32 2, %s376
          %s379 = ssub.s32 128, 128
          %380 = vsyncadd %s370, %s379
          %s381 = smul.addr %s34, 4
          %s382 = sadd.s32 %s377, %s381
          %s383 = smul.addr %s382, 64
          %s384 = scalar_lea.hbm %s3, %s383
          %s385 = sshll.u32 %s373, 4
          %s386 = int_to_ptr.vmem [resolvable:$true] %s385
          %391 = dma.hbm_to_vmem [thread:$0]  %s384, 128, %s386, %s370, 64, 64, 4
        $region32: #{tpu_custom_call.1} parent=15 // pred_fallthru
          _
        // Predicated region
        $region33: #{tpu_custom_call.1} parent=15 // pred_check
          %p392 = pneg %p185
        $region34: #{tpu_custom_call.1} parent=15 // pred_check_branch
          %394 = sbr.rel (%p392) target = $region36
        $region35: #{tpu_custom_call.1} parent=15 // pred_region
          #allocation17 [shape = 'u32[6]{0}', space=smem, size = 0x18, scoped, tag = 'DMA stride descriptor']
          %s395 = sand.u32 %s27, 1
          %s396 = scalar_lea.sflag [#allocation9], %s395
          %s397 = sand.u32 %s175, 1
          %s398 = smul.addr %s397, 24
          %s399 = scalar_lea.vmem [#allocation10], %s398
          %s400 = sadd.s32 %s35, 1
          %p401 = scmp.lt.s32.totalorder %s400, 1
          %s402 = scalar_select %p401, %s400, 1
          %s403 = smul.u32 2, %s402
          %s405 = ssub.s32 384, 384
          %406 = vsyncadd %s396, %s405
          %s407 = smul.addr %s34, 24
          %s408 = sadd.s32 %s403, %s407
          %s409 = smul.addr %s408, 64
          %s410 = scalar_lea.hbm %s4, %s409
          %s412 = sshll.u32 1, 14
          %s413 = sxor.u32 4294967295, %s412
          %s415 = sld [smem:[#allocation0]]
          %s416 = sadd.s32 2, %s415
          %s418 = sshll.u32 7, 26
          %s419 = sxor.u32 4294967295, %s418
          %s420 = sand.u32 0, %s419
          %s421 = sshll.u32 %s416, 26
          %s422 = sor.u32 %s420, %s421
          %s423 = sshll.u32 %s399, 4
          %s424 = int_to_ptr.vmem [resolvable:$true] %s423
          %430 = sst [smem:[#allocation17]] 256
          %s431 = scalar_lea.smem [#allocation17], 1
          %432 = sst [smem:[%s431]] 128
          %s433 = scalar_lea.smem [#allocation17], 2
          %434 = sst [smem:[%s433]] 2
          %s435 = scalar_lea.smem [#allocation17], 3
          %436 = sst [smem:[%s435]] 64
          %s437 = scalar_lea.smem [#allocation17], 4
          %438 = sst [smem:[%s437]] 64
          %s439 = scalar_lea.smem [#allocation17], 5
          %440 = sst [smem:[%s439]] 4
          %442 = dma.general %s410, 384, %s424, %s396, [#allocation16], [#allocation17], %s422, 0
        $region36: #{tpu_custom_call.1} parent=15 // pred_fallthru
          _
        // Predicated region
        $region37: #{tpu_custom_call.1} parent=15 // pred_check
          %p443 = pneg %p219
        $region38: #{tpu_custom_call.1} parent=15 // pred_check_branch
          %445 = sbr.rel (%p443) target = $region40
        $region39: #{tpu_custom_call.1} parent=15 // pred_region
          %s446 = sand.u32 %s209, 1
          %s447 = scalar_lea.sflag [#allocation12], %s446
          %s448 = sand.u32 %s209, 1
          %s449 = smul.addr %s448, 8
          %s450 = scalar_lea.vmem [#allocation11], %s449
          %s451 = sadd.s32 %s35, 1
          %p452 = scmp.lt.s32.totalorder %s451, 1
          %s453 = scalar_select %p452, %s451, 1
          %s454 = smul.u32 2, %s453
          %s456 = ssub.s32 128, 128
          %457 = vsyncadd %s447, %s456
          %s458 = smul.addr %s34, 8
          %s459 = sadd.s32 %s454, %s458
          %s460 = smul.addr %s459, 64
          %s461 = scalar_lea.hbm %s5, %s460
          %s462 = sshll.u32 %s450, 4
          %s463 = int_to_ptr.vmem [resolvable:$true] %s462
          %468 = dma.hbm_to_vmem [thread:$0]  %s461, 128, %s463, %s447, 64, 64, 4
        $region40: #{tpu_custom_call.1} parent=15 // pred_fallthru
          _
      $region16: #{tpu_custom_call.1} parent=5 // pred_fallthru
        _
      %p469 = scmp.le.s32.totalorder 1, %s27
      %p470 = scmp.lt.s32.totalorder %s27, 5
      %p471 = pnand %p469, %p470
      %p472 = pneg %p471
      // Predicated region
      $region41: #{tpu_custom_call.1} parent=5 // pred_check
        _
      $region42: #{tpu_custom_call.1} parent=5 // pred_check_branch
        %474 = sbr.rel (%p471) target = $region44
      $region43: #{tpu_custom_call.1} parent=5 // pred_region
        %s475 = ssub.s32 %s27, 1
        %s476 = sand.u32 %s54, 1
        %s477 = scalar_lea.sflag [#allocation3], %s476
        %s478 = sand.u32 %s54, 1
        %s479 = smul.addr %s478, 8
        %s480 = scalar_lea.vmem [#allocation2], %s479
        // Predicated region
        $region45: #{tpu_custom_call.1} parent=43 // pred_check
          %p481 = pneg %p67
        $region46: #{tpu_custom_call.1} parent=43 // pred_check_branch
          %483 = sbr.rel (%p481) target = $region48
        $region47: #{tpu_custom_call.1} parent=43 // pred_region
          %484 = dma.done %s477, 128
        $region48: #{tpu_custom_call.1} parent=43 // pred_fallthru
          _
        %s485 = sand.u32 %s32, 1
        %s486 = scalar_lea.sflag [#allocation6], %s485
        %s487 = sand.u32 %s82, 1
        %s488 = smul.addr %s487, 24
        %s489 = scalar_lea.vmem [#allocation5], %s488
        // Predicated region
        $region49: #{tpu_custom_call.1} parent=43 // pred_check
          %p490 = pneg %p95
        $region50: #{tpu_custom_call.1} parent=43 // pred_check_branch
          %492 = sbr.rel (%p490) target = $region52
        $region51: #{tpu_custom_call.1} parent=43 // pred_region
          %493 = dma.done %s486, 384
        $region52: #{tpu_custom_call.1} parent=43 // pred_fallthru
          _
        %s494 = sand.u32 %s32, 1
        %s495 = scalar_lea.sflag [#allocation6], %s494
        %s496 = sand.u32 %s110, 1
        %s497 = smul.addr %s496, 8
        %s498 = scalar_lea.vmem [#allocation7], %s497
        // Predicated region
        $region53: #{tpu_custom_call.1} parent=43 // pred_check
          %p499 = pneg %p123
        $region54: #{tpu_custom_call.1} parent=43 // pred_check_branch
          %501 = sbr.rel (%p499) target = $region56
        $region55: #{tpu_custom_call.1} parent=43 // pred_region
          %502 = dma.done %s495, 128
        $region56: #{tpu_custom_call.1} parent=43 // pred_fallthru
          _
        %s503 = sand.u32 %s32, 1
        %s504 = scalar_lea.sflag [#allocation9], %s503
        %s505 = sand.u32 %s144, 1
        %s506 = smul.addr %s505, 8
        %s507 = scalar_lea.vmem [#allocation8], %s506
        // Predicated region
        $region57: #{tpu_custom_call.1} parent=43 // pred_check
          %p508 = pneg %p157
        $region58: #{tpu_custom_call.1} parent=43 // pred_check_branch
          %510 = sbr.rel (%p508) target = $region60
        $region59: #{tpu_custom_call.1} parent=43 // pred_region
          %511 = dma.done %s504, 128
        $region60: #{tpu_custom_call.1} parent=43 // pred_fallthru
          _
        %s512 = sand.u32 %s32, 1
        %s513 = scalar_lea.sflag [#allocation9], %s512
        %s514 = sand.u32 %s178, 1
        %s515 = smul.addr %s514, 24
        %s516 = scalar_lea.vmem [#allocation10], %s515
        // Predicated region
        $region61: #{tpu_custom_call.1} parent=43 // pred_check
          %p517 = pneg %p191
        $region62: #{tpu_custom_call.1} parent=43 // pred_check_branch
          %519 = sbr.rel (%p517) target = $region64
        $region63: #{tpu_custom_call.1} parent=43 // pred_region
          %520 = dma.done %s513, 384
        $region64: #{tpu_custom_call.1} parent=43 // pred_fallthru
          _
        %s521 = sand.u32 %s212, 1
        %s522 = scalar_lea.sflag [#allocation12], %s521
        %s523 = sand.u32 %s212, 1
        %s524 = smul.addr %s523, 8
        %s525 = scalar_lea.vmem [#allocation11], %s524
        // Predicated region
        $region65: #{tpu_custom_call.1} parent=43 // pred_check
          %p526 = pneg %p225
        $region66: #{tpu_custom_call.1} parent=43 // pred_check_branch
          %528 = sbr.rel (%p526) target = $region68
        $region67: #{tpu_custom_call.1} parent=43 // pred_region
          %529 = dma.done %s522, 128
        $region68: #{tpu_custom_call.1} parent=43 // pred_fallthru
          _
        %s530 = sand.u32 %s54, 1
        %s531 = scalar_lea.sflag [#allocation3], %s530
        %s532 = sand.u32 %s54, 1
        %s533 = smul.addr %s532, 8
        %s534 = scalar_lea.vmem [#allocation2], %s533
        %p535 = pneg %p67
        %p536 = pneg %p64
        %s537 = sand.u32 %s32, 1
        %s538 = scalar_lea.sflag [#allocation6], %s537
        %s539 = sand.u32 %s82, 1
        %s540 = smul.addr %s539, 24
        %s541 = scalar_lea.vmem [#allocation5], %s540
        %p542 = pneg %p95
        %p543 = pneg %p92
        %s544 = sand.u32 %s32, 1
        %s545 = scalar_lea.sflag [#allocation6], %s544
        %s546 = sand.u32 %s110, 1
        %s547 = smul.addr %s546, 8
        %s548 = scalar_lea.vmem [#allocation7], %s547
        %p549 = pneg %p123
        %p550 = pneg %p120
        %s551 = sand.u32 %s32, 1
        %s552 = scalar_lea.sflag [#allocation9], %s551
        %s553 = sand.u32 %s144, 1
        %s554 = smul.addr %s553, 8
        %s555 = scalar_lea.vmem [#allocation8], %s554
        %p556 = pneg %p157
        %p557 = pneg %p154
        %s558 = sand.u32 %s32, 1
        %s559 = scalar_lea.sflag [#allocation9], %s558
        %s560 = sand.u32 %s178, 1
        %s561 = smul.addr %s560, 24
        %s562 = scalar_lea.vmem [#allocation10], %s561
        %p563 = pneg %p191
        %p564 = pneg %p188
        %s565 = sand.u32 %s212, 1
        %s566 = scalar_lea.sflag [#allocation12], %s565
        %s567 = sand.u32 %s212, 1
        %s568 = smul.addr %s567, 8
        %s569 = scalar_lea.vmem [#allocation11], %s568
        %p570 = pneg %p225
        %p571 = pneg %p222
        %p572 = pneg %p253
        %p573 = pneg %p250
        %s574 = sand.u32 %s240, 1
        %s575 = scalar_lea.sflag [#allocation4], %s574
        %s576 = sand.u32 %s240, 1
        %s577 = smul.addr %s576, 8
        %s578 = scalar_lea.vmem [#allocation13], %s577
        %s579 = smul.u32 2, %s37
        %s580 = smul.u32 2, %s37
        %s581 = smul.u32 2, %s37
        %s582 = sadd.s32 %s37, 1
        %p583 = scmp.lt.s32.totalorder %s582, 1
        %s584 = scalar_select %p583, %s582, 1
        %s585 = smul.u32 2, %s584
        %s586 = sadd.s32 %s37, 1
        %p587 = scmp.lt.s32.totalorder %s586, 1
        %s588 = scalar_select %p587, %s586, 1
        %s589 = smul.u32 2, %s588
        %s590 = sadd.s32 %s37, 1
        %p591 = scmp.lt.s32.totalorder %s590, 1
        %s592 = scalar_select %p591, %s590, 1
        %s593 = smul.u32 2, %s592
        %v594 = vld [vmem:[%s480] sm:$0xf]
        %v595 = vld [vmem:[%s480 + $0x4] sm:$0xf]
        %v596 = vunpack.c.l.bf16 %v594
        %v597 = vunpack.c.l.bf16 %v595
        %v598 = vld [vmem:[%s489] sm:$0xf]
        %v599 = vld [vmem:[%s489 + $0x4] sm:$0xf]
        %v600 = vld [vmem:[%s489 + $0x8] sm:$0xf]
        %v601 = vld [vmem:[%s489 + $0xc] sm:$0xf]
        %v602 = vld [vmem:[%s489 + $0x10] sm:$0xf]
        %v603 = vld [vmem:[%s489 + $0x14] sm:$0xf]
        %v604 = vunpack.c.l.bf16 %v598
        %v605 = vunpack.c.l.bf16 %v599
        %v606 = vunpack.c.l.bf16 %v600
        %v607 = vunpack.c.l.bf16 %v601
        %v608 = vunpack.c.l.bf16 %v602
        %v609 = vunpack.c.l.bf16 %v603
        %v610 = vld [vmem:[%s498] sm:$0xf]
        %v611 = vld [vmem:[%s498 + $0x4] sm:$0xf]
        %v612 = vunpack.c.l.bf16 %v610
        %v613 = vunpack.c.l.bf16 %v611
        %v614 = vmul.f32 %v604, %v612
        %v615 = vmul.f32 %v605, %v613
        %v616 = vmul.f32 %v606, %v612
        %v617 = vmul.f32 %v607, %v613
        %v618 = vmul.f32 %v608, %v612
        %v619 = vmul.f32 %v609, %v613
        %620 = vrot.lane.b32.xlu0 %v614, 127
        %v621 = vpop.permute.xlu0 %620
        %622 = vrot.lane.b32.xlu0 %v615, 127
        %v623 = vpop.permute.xlu0 %622
        %624 = vrot.lane.b32.xlu0 %v616, 127
        %v625 = vpop.permute.xlu0 %624
        %626 = vrot.lane.b32.xlu0 %v617, 127
        %v627 = vpop.permute.xlu0 %626
        %628 = vrot.lane.b32.xlu0 %v618, 127
        %v629 = vpop.permute.xlu0 %628
        %630 = vrot.lane.b32.xlu0 %v619, 127
        %v631 = vpop.permute.xlu0 %630
        %632 = vrot.lane.b32.xlu0 %v596, 127
        %v633 = vpop.permute.xlu0 %632
        %634 = vrot.lane.b32.xlu0 %v597, 127
        %v635 = vpop.permute.xlu0 %634
        %v636 = vsub.f32 %v621, %v614
        %v637 = vsub.f32 %v623, %v615
        %v638 = vsub.f32 %v625, %v616
        %v639 = vsub.f32 %v627, %v617
        %v640 = vsub.f32 %v629, %v618
        %v641 = vsub.f32 %v631, %v619
        %v642 = vsub.f32 %v633, %v596
        %v643 = vsub.f32 %v635, %v597
        %v644 = vrot.slane %v614, 1
        %v645 = vrot.slane %v616, 1
        %v646 = vrot.slane %v618, 1
        %v647 = vrot.slane %v596, 1
        %v648 = vrot.slane %v615, 1
        %v649 = vrot.slane %v617, 1
        %v650 = vrot.slane %v619, 1
        %v651 = vrot.slane %v597, 1
        %v652 = vlaneseq
        %v653 = vshrl.u32 %v652, 7
        %vm654 = vcmp.lt.s32.totalorder %v653, 7
        %v655 = vsel %vm654, %v644, %v648
        %v656 = vsel %vm654, %v645, %v649
        %v657 = vsel %vm654, %v646, %v650
        %v658 = vsel %vm654, %v647, %v651
        %v659 = vsel %vm654, %v648, %v644
        %v660 = vsel %vm654, %v649, %v645
        %v661 = vsel %vm654, %v650, %v646
        %v662 = vsel %vm654, %v651, %v647
        %v663 = vsub.f32 %v655, %v614
        %v664 = vsub.f32 %v659, %v615
        %v665 = vsub.f32 %v656, %v616
        %v666 = vsub.f32 %v660, %v617
        %v667 = vsub.f32 %v657, %v618
        %v668 = vsub.f32 %v661, %v619
        %v669 = vsub.f32 %v658, %v596
        %v670 = vsub.f32 %v662, %v597
        %v671 = vand.u32 2147483647, %v636
        %v672 = vand.u32 2147483647, %v637
        %v673 = vand.u32 2147483647, %v638
        %v674 = vand.u32 2147483647, %v639
        %v675 = vand.u32 2147483647, %v640
        %v676 = vand.u32 2147483647, %v641
        %v677 = vadd.f32 %v671, %v673
        %v678 = vadd.f32 %v677, %v675
        %v679 = vadd.f32 %v672, %v674
        %v680 = vadd.f32 %v679, %v676
        %v681 = vmul.f32 %v678, -0.33333334
        %v682 = vmul.f32 %v680, -0.33333334
        %v683 = vmul.f32 %v681, 1.442695
        %v684 = vpow.pop %v683
        %v685 = vmul.f32 %v682, 1.442695
        %v686 = vpow.pop %v685
        %v687 = vand.u32 2147483647, %v663
        %v688 = vand.u32 2147483647, %v664
        %v689 = vand.u32 2147483647, %v665
        %v690 = vand.u32 2147483647, %v666
        %v691 = vand.u32 2147483647, %v667
        %v692 = vand.u32 2147483647, %v668
        %v693 = vadd.f32 %v687, %v689
        %v694 = vadd.f32 %v693, %v691
        %v695 = vadd.f32 %v688, %v690
        %v696 = vadd.f32 %v695, %v692
        %v697 = vmul.f32 %v694, -0.33333334
        %v698 = vmul.f32 %v696, -0.33333334
        %v699 = vmul.f32 %v697, 1.442695
        %v700 = vpow.pop %v699
        %v701 = vmul.f32 %v698, 1.442695
        %v702 = vpow.pop %v701
        %v703 = vmul.f32 %v684, %v642
        %v704 = vmul.f32 %v686, %v643
        %v705 = vand.u32 2147483647, %v703
        %v706 = vand.u32 2147483647, %v704
        %v707 = vmul.f32 %v700, %v669
        %v708 = vmul.f32 %v702, %v670
        %v709 = vand.u32 2147483647, %v707
        %v710 = vand.u32 2147483647, %v708
        %v711 = vadd.f32 %v705, 0.0
        %v712 = vadd.f32 %v706, 0.0
        %v713 = vadd.f32 %v711, %v712
        %v714 = vrot.slane %v713, 4
        %v715 = vadd.f32 %v713, %v714
        %v716 = vrot.slane %v715, 2
        %v717 = vadd.f32 %v715, %v716
        %v718 = vrot.slane %v717, 1
        %v719 = vadd.f32 %v717, %v718
        %vm720 = vcmask 1040384
        %v721 = vsel %vm720, %v719, 0.0
        %722 = vadd.xlane.f32.xlu0 %v721
        %v723 = vpop.xlane.xlu0 %722
        %v724 = vrot.slane %v723, 4
        %v725 = vadd.f32 %v723, %v724
        %v726 = vrot.slane %v725, 2
        %v727 = vadd.f32 %v725, %v726
        %v728 = vrot.slane %v727, 1
        %v729 = vadd.f32 %v727, %v728
        %s730 = vtos %v729
        %v731 = vadd.f32 %v719, 0.0
        %733 = vrot.lane.b32.xlu0 %v731, 2
        %v734 = vpop.permute.xlu0 %733
        %s736 = vtos %v734
        %s737 = sadd.f32 %s730, %s736
        %738 = vrot.lane.b32.xlu0 %v731, 1
        %v739 = vpop.permute.xlu0 %738
        %s741 = vtos %v739
        %s742 = ssub.f32 %s737, %s741
        %v743 = vadd.f32 %v709, 0.0
        %v744 = vadd.f32 %v710, 0.0
        %745 = vadd.xlane.f32.xlu0 %v743
        %v746 = vpop.xlane.xlu0 %745
        %747 = vadd.xlane.f32.xlu0 %v744
        %v748 = vpop.xlane.xlu0 %747
        %p749 = scmp.eq.s32.totalorder %s37, 1
        %v750 = vld [vmem:[%s507] sm:$0xf]
        %v751 = vunpack.c.l.bf16 %v750
        %v752 = vld [vmem:[%s516] sm:$0xf]
        %v753 = vld [vmem:[%s516 + $0x8] sm:$0xf]
        %v754 = vld [vmem:[%s516 + $0x10] sm:$0xf]
        %v755 = vunpack.c.l.bf16 %v752
        %v756 = vunpack.c.l.bf16 %v753
        %v757 = vunpack.c.l.bf16 %v754
        %v758 = vld [vmem:[%s525] sm:$0xf]
        %v759 = vunpack.c.l.bf16 %v758
        %v760 = vmul.f32 %v755, %v759
        %v761 = vmul.f32 %v756, %v759
        %v762 = vmul.f32 %v757, %v759
        %v766 = vrot.slane %v615, 7
        %v767 = vrot.slane %v617, 7
        %v768 = vrot.slane %v619, 7
        %v772 = vsub.f32 %v760, %v766
        %v773 = vsub.f32 %v761, %v767
        %v774 = vsub.f32 %v762, %v768
        %v775 = vand.u32 2147483647, %v772
        %v776 = vand.u32 2147483647, %v773
        %v777 = vand.u32 2147483647, %v774
        %v778 = vsel %vm720, %v775, 0.0
        %v779 = vsel %vm720, %v776, 0.0
        %v780 = vadd.f32 %v778, %v779
        %v781 = vsel %vm720, %v777, 0.0
        %v782 = vadd.f32 %v780, %v781
        %v783 = vmul.f32 %v782, -0.33333334
        %v784 = vmul.f32 %v783, 1.442695
        %v785 = vpow.pop %v784
        %v787 = vrot.slane %v597, 7
        %v789 = vsub.f32 %v751, %v787
        %v790 = vmul.f32 %v785, %v789
        %v791 = vand.u32 2147483647, %v790
        %v792 = vsel %vm720, %v791, 0.0
        %793 = vadd.xlane.f32.xlu0 %v792
        %v794 = vpop.xlane.xlu0 %793
        %v795 = vrot.slane %v794, 4
        %v796 = vadd.f32 %v794, %v795
        %v797 = vrot.slane %v796, 2
        %v798 = vadd.f32 %v796, %v797
        %v799 = vrot.slane %v798, 1
        %v800 = vadd.f32 %v798, %v799
        %s801 = vtos %v800
        %v802 = vadd.f32 %v748, 0.0
        %v804 = vrot.slane %v802, 6
        %s806 = vtos %v804
        %vm807 = vcmask 7168
        %v808 = vsel %vm807, %v746, 0.0
        %v809 = vsel %vm807, %v748, 0.0
        %v810 = vadd.f32 %v808, %v809
        %811 = vadd.xlane.f32.xlu0 %v810
        %v812 = vpop.xlane.xlu0 %811
        %v813 = vrot.slane %v812, 4
        %v814 = vadd.f32 %v812, %v813
        %v815 = vrot.slane %v814, 2
        %v816 = vadd.f32 %v814, %v815
        %v817 = vrot.slane %v816, 1
        %v818 = vadd.f32 %v816, %v817
        %s819 = vtos %v818
        %v820 = vrot.slane %v802, 7
        %s822 = vtos %v820
        %s823 = ssub.f32 %s819, %s822
        %s824 = scalar_select %p749, %s806, %s801
        %s825 = sadd.f32 %s823, %s824
        %s826 = sadd.f32 %s742, %s825
        %vm827 = vcmp.gt.f32.partialorder %v612, 0.5
        %vm828 = vcmp.gt.f32.partialorder %v613, 0.5
        %v829 = vsel %vm827, 1, 0
        %v830 = vsel %vm828, 1, 0
        %v831 = vcvt.s32.f32 %v829
        %v832 = vcvt.s32.f32 %v830
        %v833 = vadd.f32 %v831, %v832
        %834 = vadd.xlane.f32.xlu0 %v833
        %v835 = vpop.xlane.xlu0 %834
        %v836 = vrot.slane %v835, 4
        %v837 = vadd.f32 %v835, %v836
        %v838 = vrot.slane %v837, 2
        %v839 = vadd.f32 %v837, %v838
        %v840 = vrot.slane %v839, 1
        %v841 = vadd.f32 %v839, %v840
        %s842 = vtos %v841
        %vm843 = vcmp.eq.s32.totalorder %v653, 0
        %v844 = vstv %s826
        %v845 = vstv %s842
        %v846 = vsel %vm843, %v844, %v845
        %847 = vst [vmem:[%s578] sm:$0xff] %v846
        %s848 = sand.u32 %s240, 1
        %s849 = scalar_lea.sflag [#allocation4], %s848
        %s850 = sand.u32 %s240, 1
        %s851 = smul.addr %s850, 8
        %s852 = scalar_lea.vmem [#allocation13], %s851
        // Predicated region
        $region69: #{tpu_custom_call.1} parent=43 // pred_check
          %p853 = pneg %p250
        $region70: #{tpu_custom_call.1} parent=43 // pred_check_branch
          %855 = sbr.rel (%p853) target = $region72
        $region71: #{tpu_custom_call.1} parent=43 // pred_region
          %s857 = ssub.s32 128, 128
          %858 = vsyncadd %s849, %s857
          %s859 = smul.addr %s36, 2
          %s860 = sadd.s32 %s37, %s859
          %s861 = smul.addr %s860, 128
          %s862 = scalar_lea.hbm %s6, %s861
          %s864 = sshll.u32 %s852, 4
          %s865 = int_to_ptr.vmem [resolvable:$true] %s864
          %867 = dma.vmem_to_hbm [thread:$0]  %s865, 128, %s862, %s849
        $region72: #{tpu_custom_call.1} parent=43 // pred_fallthru
          _
      $region44: #{tpu_custom_call.1} parent=5 // pred_fallthru
        _
      %p868 = scmp.le.s32.totalorder 2, %s27
      // Predicated region
      $region73: #{tpu_custom_call.1} parent=5 // pred_check
        %p869 = pneg %p868
      $region74: #{tpu_custom_call.1} parent=5 // pred_check_branch
        %871 = sbr.rel (%p869) target = $region76
      $region75: #{tpu_custom_call.1} parent=5 // pred_region
        %s872 = ssub.s32 %s27, 2
        // Predicated region
        $region77: #{tpu_custom_call.1} parent=75 // pred_check
          %p873 = pneg %p256
        $region78: #{tpu_custom_call.1} parent=75 // pred_check_branch
          %875 = sbr.rel (%p873) target = $region80
        $region79: #{tpu_custom_call.1} parent=75 // pred_region
          %s876 = sand.u32 %s241, 1
          %s877 = scalar_lea.sflag [#allocation4], %s876
          %s878 = sand.u32 %s241, 1
          %s879 = smul.addr %s878, 8
          %s880 = scalar_lea.vmem [#allocation13], %s879
          %881 = dma.done %s877, 128
        $region80: #{tpu_custom_call.1} parent=75 // pred_fallthru
          _
      $region76: #{tpu_custom_call.1} parent=5 // pred_fallthru
        _
    $region6: #{tpu_custom_call.1} parent=1 // loop_footer
      %s31 = sadd.s32 1, %s27
    $region7: #{tpu_custom_call.1} parent=1 // loop_footer_branch
      %26 = sbr.rel target = $region3
    $region8: #{tpu_custom_call.1} parent=1 // loop_exit
      _
    %882 = vsyncpa [#allocation3], 1
    %s883 = scalar_lea.sflag [#allocation3], 1
    %884 = vsyncpa %s883, 1
    %885 = vsyncpa [#allocation6], 1
    %s886 = scalar_lea.sflag [#allocation6], 1
    %887 = vsyncpa %s886, 1
    %888 = vsyncpa [#allocation9], 1
    %s889 = scalar_lea.sflag [#allocation9], 1
    %890 = vsyncpa %s889, 1
    %891 = vsyncpa [#allocation12], 1
    %s892 = scalar_lea.sflag [#allocation12], 1
    %893 = vsyncpa %s892, 1
    %894 = vsyncpa [#allocation4], 1
    %s895 = scalar_lea.sflag [#allocation4], 1
    %896 = vsyncpa %s895, 1

</llo_original>
